<compile_context>
chip_gen: v7x
topology: tpu7x:2x2x1
jax: 0.10.0
libtpu: 0.0.40
codegen_flags: <defaults>
</compile_context>

<pallas_src>
import functools

import jax
import jax.numpy as jnp
from jax.experimental import pallas as pl
from jax.experimental.pallas import tpu as pltpu

_F32 = 4
# 32 MiB scoped VMEM is below physical on every generation (v5e/v6e: 128 MiB,
# v7x: 64 MiB per TensorCore); blocks are budgeted to ~24 MiB for headroom.
_VMEM_LIMIT_BYTES = 32 * 1024 * 1024
_BLOCK_BUDGET_BYTES = 24 * 1024 * 1024


def _round_up(a, m):
    return ((a + m - 1) // m) * m


def _pick_block_rows(n, cap_rows):
    """Legal sublane block: multiple of 8, or the full extent when n <= 8.

    For n > 8 we target >= 2 row blocks so dimension_semantics=("parallel",)
    can shard the grid across both TensorCores on v7x (harmless on v5e/v6e).
    """
    if n <= 8:
        return n
    cap = max(8, (cap_rows // 8) * 8)
    half = _round_up((n + 1) // 2, 8)
    return max(8, min(cap, half))


# --------------------------------------------------------------------------
# Fast path: one read + one write of x, full lane extent per block.
# --------------------------------------------------------------------------
def _groupnorm1_kernel(x_ref, gamma_ref, beta_ref, o_ref, *, eps, n_valid,
                       epilogue):
    # x_ref: (R, D); gamma_ref/beta_ref: (1, D). Per-row normalization over the
    # full lane extent (lane block == full array dim, so no padded lanes are
    # visible). Garbage rows of a ragged last row-block stay row-local and are
    # masked on store.
    x = x_ref[...].astype(jnp.float32)
    inv_n = jnp.float32(1.0 / n_valid)
    s1 = jnp.sum(x, axis=-1, keepdims=True)
    s2 = jnp.sum(x * x, axis=-1, keepdims=True)
    mean = s1 * inv_n
    var = jnp.maximum(s2 * inv_n - mean * mean, 0.0)  # guard single-pass var<0
    rstd = jax.lax.rsqrt(var + jnp.float32(eps))      # EUP slot, ~free
    scale = gamma_ref[...].astype(jnp.float32) * rstd
    out = (x - mean) * scale + beta_ref[...].astype(jnp.float32)
    if epilogue is not None:
        out = epilogue(out)   # must be NaN-safe: also sees masked-off garbage
    o_ref[...] = out.astype(o_ref.dtype)


# --------------------------------------------------------------------------
# Chunked two-pass path (very large C*H*W): always fits VMEM.
# --------------------------------------------------------------------------
def _stats_kernel(x_ref, mean_ref, rstd_ref, *, eps, n_valid, chunk):
    # Pass 1: accumulate per-row sum / sum-of-squares in the resident output
    # blocks; finalize to (mean, rstd) on the last lane chunk.
    j = pl.program_id(1)

    @pl.when(j == 0)
    def _():
        mean_ref[...] = jnp.zeros_like(mean_ref)
        rstd_ref[...] = jnp.zeros_like(rstd_ref)

    x = x_ref[...].astype(jnp.float32)
    lane = jax.lax.broadcasted_iota(jnp.int32, x.shape, 1)
    x = jnp.where(j * chunk + lane < n_valid, x, 0.0)   # mask ragged tail
    mean_ref[...] += jnp.sum(x, axis=-1, keepdims=True)       # holds s1
    rstd_ref[...] += jnp.sum(x * x, axis=-1, keepdims=True)   # holds s2

    @pl.when(j == pl.num_programs(1) - 1)
    def _():
        inv_n = jnp.float32(1.0 / n_valid)
        mean = mean_ref[...] * inv_n
        var = jnp.maximum(rstd_ref[...] * inv_n - mean * mean, 0.0)
        mean_ref[...] = mean
        rstd_ref[...] = jax.lax.rsqrt(var + jnp.float32(eps))


def _apply_kernel(x_ref, mean_ref, rstd_ref, gamma_ref, beta_ref, o_ref, *,
                  epilogue):
    # Pass 2: elementwise normalize + affine (+ optional fused epilogue).
    x = x_ref[...].astype(jnp.float32)
    scale = gamma_ref[...].astype(jnp.float32) * rstd_ref[...]
    out = (x - mean_ref[...]) * scale + beta_ref[...].astype(jnp.float32)
    if epilogue is not None:
        out = epilogue(out)
    o_ref[...] = out.astype(o_ref.dtype)


def group_norm1_pallas(x, gamma, beta, *, eps=1e-5, epilogue=None,
                       force_chunked=False, lane_chunk=None):
    """GroupNorm(num_groups=1, num_channels=C) on NCHW input via Pallas."""
    N, C, H, W = x.shape
    D = C * H * W
    itemsize = jnp.dtype(x.dtype).itemsize
    d_pad = _round_up(D, 128)      # internal VMEM lane padding (accounting only)

    x2 = x.reshape(N, D)
    gamma_b = jnp.repeat(gamma.astype(jnp.float32), H * W).reshape(1, D)
    beta_b = jnp.repeat(beta.astype(jnp.float32), H * W).reshape(1, D)

    # Dtype-aware VMEM estimate for a (rows, D) fast-path block:
    #   x + out double-buffered in x.dtype, gamma/beta double-buffered f32
    #   (grid-invariant; small in this regime, fully accounted here), plus
    #   ~3 f32-sized intermediates for the cast/normalize chain.
    def fast_vmem_bytes(rows):
        rp = _round_up(rows, 8)
        return (4 * rp * d_pad * itemsize        # (x + out) * 2 buffers
                + 4 * d_pad * _F32               # gamma + beta * 2 buffers
                + 3 * rp * d_pad * _F32)         # f32 temporaries

    min_rows = N if N <= 8 else 8
    use_fast = (not force_chunked) and (
        fast_vmem_bytes(min_rows) <= _BLOCK_BUDGET_BYTES)

    if use_fast:
        per_row = 4 * d_pad * itemsize + 3 * d_pad * _F32
        fixed = 4 * d_pad * _F32
        cap_rows = max(1, (_BLOCK_BUDGET_BYTES - fixed) // per_row)
        block_rows = _pick_block_rows(N, cap_rows)
        grid = (pl.cdiv(N, block_rows),)

        cost = pl.CostEstimate(
            flops=8 * N * D,
            transcendentals=N,
            bytes_accessed=2 * N * D * itemsize + 2 * D * _F32)

        # TODO(synk): when the caller can donate x, add
        # input_output_aliases={0: 0} to reuse x's HBM buffer for the output.
        out = pl.pallas_call(
            functools.partial(_groupnorm1_kernel, eps=eps, n_valid=D,
                              epilogue=epilogue),
            out_shape=jax.ShapeDtypeStruct((N, D), x.dtype),
            grid_spec=pltpu.PrefetchScalarGridSpec(
                num_scalar_prefetch=0,
                grid=grid,
                in_specs=[
                    pl.BlockSpec((block_rows, D), lambda i: (i, 0)),
                    pl.BlockSpec((1, D), lambda i: (0, 0)),
                    pl.BlockSpec((1, D), lambda i: (0, 0)),
                ],
                out_specs=pl.BlockSpec((block_rows, D), lambda i: (i, 0)),
            ),
            compiler_params=pltpu.CompilerParams(
                dimension_semantics=("parallel",),
                vmem_limit_bytes=_VMEM_LIMIT_BYTES,
            ),
            cost_estimate=cost,
        )(x2, gamma_b, beta_b)
        return out.reshape(N, C, H, W)

    # ---- chunked two-pass fallback (huge D, e.g. 512x32x32 on v7x) ---------
    chunk = lane_chunk if lane_chunk is not None else min(d_pad, 32 * 1024)
    chunk = _round_up(min(chunk, d_pad), 128)
    n_chunks = pl.cdiv(D, chunk)

    per_row = 4 * chunk * itemsize + 3 * chunk * _F32
    fixed = 4 * chunk * _F32
    cap_rows = max(1, (_BLOCK_BUDGET_BYTES - fixed) // per_row)
    block_rows = _pick_block_rows(N, cap_rows)
    row_blocks = pl.cdiv(N, block_rows)

    stats_cost = pl.CostEstimate(
        flops=3 * N * D, transcendentals=N,
        bytes_accessed=N * D * itemsize + 8 * N)
    mean, rstd = pl.pallas_call(
        functools.partial(_stats_kernel, eps=eps, n_valid=D, chunk=chunk),
        out_shape=(jax.ShapeDtypeStruct((N, 1), jnp.float32),
                   jax.ShapeDtypeStruct((N, 1), jnp.float32)),
        grid_spec=pltpu.PrefetchScalarGridSpec(
            num_scalar_prefetch=0,
            grid=(row_blocks, n_chunks),
            in_specs=[pl.BlockSpec((block_rows, chunk), lambda i, j: (i, j))],
            out_specs=[pl.BlockSpec((block_rows, 1), lambda i, j: (i, 0)),
                       pl.BlockSpec((block_rows, 1), lambda i, j: (i, 0))],
        ),
        compiler_params=pltpu.CompilerParams(
            dimension_semantics=("parallel", "arbitrary"),
            vmem_limit_bytes=_VMEM_LIMIT_BYTES,
        ),
        cost_estimate=stats_cost,
    )(x2)

    apply_cost = pl.CostEstimate(
        flops=4 * N * D, transcendentals=0,
        bytes_accessed=2 * N * D * itemsize + 2 * D * _F32 + 8 * N)
    out = pl.pallas_call(
        functools.partial(_apply_kernel, epilogue=epilogue),
        out_shape=jax.ShapeDtypeStruct((N, D), x.dtype),
        grid_spec=pltpu.PrefetchScalarGridSpec(
            num_scalar_prefetch=0,
            grid=(row_blocks, n_chunks),
            in_specs=[
                pl.BlockSpec((block_rows, chunk), lambda i, j: (i, j)),
                pl.BlockSpec((block_rows, 1), lambda i, j: (i, 0)),
                pl.BlockSpec((block_rows, 1), lambda i, j: (i, 0)),
                pl.BlockSpec((1, chunk), lambda i, j: (0, j)),
                pl.BlockSpec((1, chunk), lambda i, j: (0, j)),
            ],
            out_specs=pl.BlockSpec((block_rows, chunk), lambda i, j: (i, j)),
        ),
        compiler_params=pltpu.CompilerParams(
            dimension_semantics=("parallel", "parallel"),
            vmem_limit_bytes=_VMEM_LIMIT_BYTES,
        ),
        cost_estimate=apply_cost,
    )(x2, mean, rstd, gamma_b, beta_b)
    return out.reshape(N, C, H, W)


def pre_norm(x, gamma, beta, fn, *, eps=1e-5, fuse_elementwise_fn=False):
    """PreNorm.forward: fn(GroupNorm(1, dim)(x)).

    If `fn` is purely elementwise (and NaN-safe on garbage, since it also runs
    on masked-off padded lanes/rows), pass fuse_elementwise_fn=True to fold it
    into the kernel store and save a full HBM round trip.
    """
    # TODO(synk): `fn` is an arbitrary wrapped module (attention / conv block)
    # in the PyTorch code; non-elementwise fns stay as plain JAX callables.
    if fuse_elementwise_fn:
        return group_norm1_pallas(x, gamma, beta, eps=eps, epilogue=fn)
    return fn(group_norm1_pallas(x, gamma, beta, eps=eps))


def _ref_prenorm(x, gamma, beta, fn, eps=1e-5):
    N, C, H, W = x.shape
    xf = x.astype(jnp.float32).reshape(N, -1)
    mean = xf.mean(axis=1).reshape(N, 1, 1, 1)
    var = xf.var(axis=1).reshape(N, 1, 1, 1)
    y = (x.astype(jnp.float32) - mean) * jax.lax.rsqrt(var + eps)
    y = y * gamma.reshape(1, C, 1, 1) + beta.reshape(1, C, 1, 1)
    return fn(y.astype(x.dtype))


if __name__ == "__main__":
    key = jax.random.PRNGKey(0)
    fn = lambda y: y  # identity stand-in for the wrapped module

    def check(out, ref, tag):
        assert out.shape == ref.shape, (tag, out.shape, ref.shape)
        err = float(jnp.max(jnp.abs(out - ref)))
        assert jnp.allclose(out, ref, atol=1e-4, rtol=1e-4), (tag, err)

    # 1) base case: (2, 4, 16, 16) -> D = 1024, single-pass fast path.
    kx, kg, kb = jax.random.split(key, 3)
    x = jax.random.normal(kx, (2, 4, 16, 16), dtype=jnp.float32)
    gamma = jax.random.normal(kg, (4,), dtype=jnp.float32)
    beta = jax.random.normal(kb, (4,), dtype=jnp.float32)
    out = jax.block_until_ready(pre_norm(x, gamma, beta, fn))
    check(out, _ref_prenorm(x, gamma, beta, fn), "fast")

    # 2) fused elementwise fn epilogue.
    out = jax.block_until_ready(
        pre_norm(x, gamma, beta, lambda y: y * 2.0, fuse_elementwise_fn=True))
    check(out, _ref_prenorm(x, gamma, beta, lambda y: y * 2.0), "fused")

    # 3) D not a multiple of 128: no wrapper pad/slice, masked tail stores.
    x3 = jax.random.normal(kx, (3, 3, 10, 10), dtype=jnp.float32)
    g3 = jax.random.normal(kg, (3,), dtype=jnp.float32)
    b3 = jax.random.normal(kb, (3,), dtype=jnp.float32)
    out = jax.block_until_ready(pre_norm(x3, g3, b3, fn))
    check(out, _ref_prenorm(x3, g3, b3, fn), "ragged-D")

    # 4) N > 8: multiple row blocks (>=2 for megacore), ragged last block.
    x4 = jax.random.normal(kx, (10, 4, 8, 8), dtype=jnp.float32)
    out = jax.block_until_ready(pre_norm(x4, gamma, beta, fn))
    check(out, _ref_prenorm(x4, gamma, beta, fn), "multi-row-block")

    # 5) chunked two-pass path (forced with a tiny lane chunk to exercise it).
    out = jax.block_until_ready(
        group_norm1_pallas(x4, gamma, beta, force_chunked=True,
                           lane_chunk=128))
    check(out, _ref_prenorm(x4, gamma, beta, fn), "chunked")

    print("KERNEL_OK")
</pallas_src>

<mosaic_0001>
module attributes {stable_mosaic.version = 11 : i64} {
  func.func @_groupnorm1_kernel(%arg0: i32, %arg1: memref<2x1024xf32, #tpu.memory_space<vmem>>, %arg2: memref<1x1024xf32, #tpu.memory_space<vmem>>, %arg3: memref<1x1024xf32, #tpu.memory_space<vmem>>, %arg4: memref<2x1024xf32, #tpu.memory_space<vmem>>) attributes {dimension_semantics = [#tpu.dimension_semantics<parallel>], iteration_bounds = array<i64: 1>, scalar_prefetch = 0 : i64, scratch_operands = 0 : i64, tpu.core_type = #tpu.core_type<tc>, window_params = [{transform_indices = @transform_0, window_bounds = array<i64: 2, 1024>}, {pipeline_mode = #tpu.pipeline_mode<synchronous>, transform_indices = @transform_1, window_bounds = array<i64: 1, 1024>}, {pipeline_mode = #tpu.pipeline_mode<synchronous>, transform_indices = @transform_2, window_bounds = array<i64: 1, 1024>}, {transform_indices = @transform_3, window_bounds = array<i64: 2, 1024>}]} {
    %c0 = arith.constant 0 : index
    %c0_0 = arith.constant 0 : index
    %0 = vector.load %arg1[%c0, %c0_0] : memref<2x1024xf32, #tpu.memory_space<vmem>>, vector<2x1024xf32>
    %cst = arith.constant dense<0.000000e+00> : vector<2xf32>
    %1 = vector.multi_reduction <add>, %0, %cst [1] : vector<2x1024xf32> to vector<2xf32>
    %2 = vector.shape_cast %1 : vector<2xf32> to vector<2x1xf32>
    %3 = arith.mulf %0, %0 : vector<2x1024xf32>
    %cst_1 = arith.constant dense<0.000000e+00> : vector<2xf32>
    %4 = vector.multi_reduction <add>, %3, %cst_1 [1] : vector<2x1024xf32> to vector<2xf32>
    %5 = vector.shape_cast %4 : vector<2xf32> to vector<2x1xf32>
    %cst_2 = arith.constant 9.765625E-4 : f32
    %6 = vector.broadcast %cst_2 : f32 to vector<2x1xf32>
    %7 = arith.mulf %2, %6 : vector<2x1xf32>
    %cst_3 = arith.constant 9.765625E-4 : f32
    %8 = vector.broadcast %cst_3 : f32 to vector<2x1xf32>
    %9 = arith.mulf %5, %8 : vector<2x1xf32>
    %10 = arith.mulf %7, %7 : vector<2x1xf32>
    %11 = arith.subf %9, %10 : vector<2x1xf32>
    %cst_4 = arith.constant 0.000000e+00 : f32
    %12 = vector.broadcast %cst_4 : f32 to vector<2x1xf32>
    %13 = arith.maximumf %11, %12 : vector<2x1xf32>
    %cst_5 = arith.constant 9.99999974E-6 : f32
    %14 = vector.broadcast %cst_5 : f32 to vector<2x1xf32>
    %15 = arith.addf %13, %14 : vector<2x1xf32>
    %16 = math.rsqrt %15 : vector<2x1xf32>
    %c0_6 = arith.constant 0 : index
    %c0_7 = arith.constant 0 : index
    %17 = vector.load %arg2[%c0_6, %c0_7] : memref<1x1024xf32, #tpu.memory_space<vmem>>, vector<1x1024xf32>
    %18 = vector.broadcast %17 : vector<1x1024xf32> to vector<2x1024xf32>
    %19 = vector.broadcast %16 : vector<2x1xf32> to vector<2x1024xf32>
    %20 = arith.mulf %18, %19 : vector<2x1024xf32>
    %21 = vector.broadcast %7 : vector<2x1xf32> to vector<2x1024xf32>
    %22 = arith.subf %0, %21 : vector<2x1024xf32>
    %23 = arith.mulf %22, %20 : vector<2x1024xf32>
    %c0_8 = arith.constant 0 : index
    %c0_9 = arith.constant 0 : index
    %24 = vector.load %arg3[%c0_8, %c0_9] : memref<1x1024xf32, #tpu.memory_space<vmem>>, vector<1x1024xf32>
    %25 = vector.broadcast %24 : vector<1x1024xf32> to vector<2x1024xf32>
    %26 = arith.addf %23, %25 : vector<2x1024xf32>
    %c0_10 = arith.constant 0 : index
    %c0_11 = arith.constant 0 : index
    %27 = vector.load %arg4[%c0_10, %c0_11] : memref<2x1024xf32, #tpu.memory_space<vmem>>, vector<2x1024xf32>
    tpu.vector_store %arg4[%c0_10, %c0_11], %26 {strides = array<i32>} : memref<2x1024xf32, #tpu.memory_space<vmem>>, vector<2x1024xf32>,
    return
  }
  func.func @transform_0(%arg0: i32) -> (i32, i32) {
    %c0_i32 = arith.constant 0 : i32
    %c0_i32_0 = arith.constant 0 : i32
    return %arg0, %c0_i32 : i32, i32
  }
  func.func @transform_1(%arg0: i32) -> (i32, i32) {
    %c0_i32 = arith.constant 0 : i32
    %c0_i32_0 = arith.constant 0 : i32
    %c0_i32_1 = arith.constant 0 : i32
    return %c0_i32, %c0_i32_0 : i32, i32
  }
  func.func @transform_2(%arg0: i32) -> (i32, i32) {
    %c0_i32 = arith.constant 0 : i32
    %c0_i32_0 = arith.constant 0 : i32
    %c0_i32_1 = arith.constant 0 : i32
    return %c0_i32, %c0_i32_0 : i32, i32
  }
  func.func @transform_3(%arg0: i32) -> (i32, i32) {
    %c0_i32 = arith.constant 0 : i32
    %c0_i32_0 = arith.constant 0 : i32
    return %arg0, %c0_i32 : i32, i32
  }
}

</mosaic_0001>

<llo_original>
// kernel: tpu_custom_call.1
$region0: #{tpu_custom_call.1}
  #allocation0 [shape = 'u32[]', space=smem, size = 0x4, offset = 0x4, fixed_abs, tag = 'smem constant byte address 0x4 - core index']
  #allocation1 [shape = 'u32[144,128]{1,0:T(1,128)}', space=vmem, size = 0x12000, scoped, tag = 'internal scratch']
  %s0 = inlined_call_operand.hbm [shape: f32[2,1024], index: 0, kind: input, shape index: {}]
  %s1 = inlined_call_operand.hbm [shape: f32[1,1024], index: 1, kind: input, shape index: {}]
  %s2 = inlined_call_operand.hbm [shape: f32[1,1024], index: 2, kind: input, shape index: {}]
  %s3 = inlined_call_operand.hbm [shape: f32[2,1024], index: 3, kind: output, shape index: {}]
  %s4 = sld [smem:[#allocation0]]
  $region34: #{tpu_custom_call.1} parent=0
    _
  %s6 = ssub.s32 1, %s4
  %s7 = scalar_select 0, %s6, %s4
  $region1: #{tpu_custom_call.1} parent=0
    #allocation2 [shape = 'u8[8192]{0}', space=vmem, size = 0x2000, scoped, tag = 'input window, operand 0, single buffered']
    #allocation3 [shape = 's32[1]{0}', space=sflag, size = 0x4, scoped, tag = 'scoped memory for tpu_custom_call.1']
    #allocation4 [shape = 's32[1]{0}', space=sflag, size = 0x4, scoped, tag = 'scoped memory for tpu_custom_call.1']
    #allocation5 [shape = 'u8[4096]{0}', space=vmem, size = 0x1000, scoped, tag = 'input window, operand 1, single buffered']
    #allocation6 [shape = 's32[1]{0}', space=sflag, size = 0x4, scoped, tag = 'scoped memory for tpu_custom_call.1']
    #allocation7 [shape = 'u8[4096]{0}', space=vmem, size = 0x1000, scoped, tag = 'input window, operand 2, single buffered']
    #allocation8 [shape = 'u8[8192]{0}', space=vmem, size = 0x2000, scoped, tag = 'output window, operand 0, single buffered']
    %8 = vsyncpa [#allocation3], 0
    %9 = vsyncpa [#allocation6], 0
    %10 = vsyncpa [#allocation4], 0
    // Predicated region
    $region2: #{tpu_custom_call.1} parent=1 // pred_check
      _
    $region3: #{tpu_custom_call.1} parent=1 // pred_check_branch
      %12 = sbr.rel (0) target = $region5
    $region4: #{tpu_custom_call.1} parent=1 // pred_region
      %s14 = ssub.s32 256, 256
      %15 = vsyncadd [#allocation3], %s14
      %s17 = sshll.u32 [#allocation2], 4
      %s18 = int_to_ptr.vmem [resolvable:$true] %s17
      %20 = dma.hbm_to_vmem [thread:$0]  %s0, 256, %s18, [#allocation3]
    $region5: #{tpu_custom_call.1} parent=1 // pred_fallthru
      _
    // Predicated region
    $region6: #{tpu_custom_call.1} parent=1 // pred_check
      _
    $region7: #{tpu_custom_call.1} parent=1 // pred_check_branch
      %22 = sbr.rel (0) target = $region9
    $region8: #{tpu_custom_call.1} parent=1 // pred_region
      %s24 = ssub.s32 128, 128
      %25 = vsyncadd [#allocation6], %s24
      %s27 = sshll.u32 [#allocation5], 4
      %s28 = int_to_ptr.vmem [resolvable:$true] %s27
      %30 = dma.hbm_to_vmem [thread:$0]  %s1, 128, %s28, [#allocation6]
    $region9: #{tpu_custom_call.1} parent=1 // pred_fallthru
      _
    // Predicated region
    $region10: #{tpu_custom_call.1} parent=1 // pred_check
      _
    $region11: #{tpu_custom_call.1} parent=1 // pred_check_branch
      %32 = sbr.rel (0) target = $region13
    $region12: #{tpu_custom_call.1} parent=1 // pred_region
      %s34 = ssub.s32 128, 128
      %35 = vsyncadd [#allocation6], %s34
      %s37 = sshll.u32 [#allocation7], 4
      %s38 = int_to_ptr.vmem [resolvable:$true] %s37
      %40 = dma.hbm_to_vmem [thread:$0]  %s2, 128, %s38, [#allocation6]
    $region13: #{tpu_custom_call.1} parent=1 // pred_fallthru
      _
    // Predicated region
    $region14: #{tpu_custom_call.1} parent=1 // pred_check
      _
    $region15: #{tpu_custom_call.1} parent=1 // pred_check_branch
      %42 = sbr.rel (0) target = $region17
    $region16: #{tpu_custom_call.1} parent=1 // pred_region
      %43 = dma.done [#allocation3], 256
    $region17: #{tpu_custom_call.1} parent=1 // pred_fallthru
      _
    // Predicated region
    $region18: #{tpu_custom_call.1} parent=1 // pred_check
      _
    $region19: #{tpu_custom_call.1} parent=1 // pred_check_branch
      %45 = sbr.rel (0) target = $region21
    $region20: #{tpu_custom_call.1} parent=1 // pred_region
      %46 = dma.done [#allocation6], 128
    $region21: #{tpu_custom_call.1} parent=1 // pred_fallthru
      _
    // Predicated region
    $region22: #{tpu_custom_call.1} parent=1 // pred_check
      _
    $region23: #{tpu_custom_call.1} parent=1 // pred_check_branch
      %48 = sbr.rel (0) target = $region25
    $region24: #{tpu_custom_call.1} parent=1 // pred_region
      %49 = dma.done [#allocation6], 128
    $region25: #{tpu_custom_call.1} parent=1 // pred_fallthru
      _
    %v50 = vld [vmem:[#allocation2] sm:$0xff]
    %v51 = vld [vmem:[#allocation2 + $0x8] sm:$0xff]
    %v54 = vcombine.high %v50, %v50
    %v56 = vunpack.c.l.s4 1983009808
    %v57 = vunpack.c.0.s8 %v56
    %v58 = vlaneseq
    %v59 = vshrl.u32 %v58, 7
    %v60 = vsub.s32 %v57, %v59
    %v61 = vrot.slane %v50, %v60
    %v63 = vunpack.c.l.s4 1983009808
    %v64 = vunpack.c.0.s8 %v63
    %v65 = vlaneseq
    %v66 = vshrl.u32 %v65, 7
    %v67 = vsub.s32 %v64, %v66
    %v68 = vrot.slane %v54, %v67
    %v69 = vcombine.high %v61, %v61
    %v70 = vcombine.high %v68, %v68
    %v71 = vcombine.high %v51, %v51
    %v73 = vunpack.c.l.s4 1983009808
    %v74 = vunpack.c.0.s8 %v73
    %v75 = vlaneseq
    %v76 = vshrl.u32 %v75, 7
    %v77 = vsub.s32 %v74, %v76
    %v78 = vrot.slane %v51, %v77
    %v80 = vunpack.c.l.s4 1983009808
    %v81 = vunpack.c.0.s8 %v80
    %v82 = vlaneseq
    %v83 = vshrl.u32 %v82, 7
    %v84 = vsub.s32 %v81, %v83
    %v85 = vrot.slane %v71, %v84
    %v86 = vcombine.high %v78, %v78
    %v87 = vcombine.high %v85, %v85
    %vm96 = vcmask 1041408
    %v97 = vsel %vm96, %v61, 0.0
    %v98 = vsel %vm96, %v69, 0.0
    %v99 = vadd.f32 %v97, %v98
    %v100 = vsel %vm96, %v68, 0.0
    %v101 = vadd.f32 %v99, %v100
    %v102 = vsel %vm96, %v70, 0.0
    %v103 = vadd.f32 %v101, %v102
    %v104 = vsel %vm96, %v78, 0.0
    %v105 = vadd.f32 %v103, %v104
    %v106 = vsel %vm96, %v86, 0.0
    %v107 = vadd.f32 %v105, %v106
    %v108 = vsel %vm96, %v85, 0.0
    %v109 = vadd.f32 %v107, %v108
    %v110 = vsel %vm96, %v87, 0.0
    %v111 = vadd.f32 %v109, %v110
    %112 = vadd.xlane.f32.xlu0 %v111
    %v113 = vpop.xlane.xlu0 %112
    %v114 = vmul.f32 %v50, %v50
    %v115 = vmul.f32 %v51, %v51
    %v118 = vcombine.high %v114, %v114
    %v120 = vunpack.c.l.s4 1983009808
    %v121 = vunpack.c.0.s8 %v120
    %v122 = vlaneseq
    %v123 = vshrl.u32 %v122, 7
    %v124 = vsub.s32 %v121, %v123
    %v125 = vrot.slane %v114, %v124
    %v127 = vunpack.c.l.s4 1983009808
    %v128 = vunpack.c.0.s8 %v127
    %v129 = vlaneseq
    %v130 = vshrl.u32 %v129, 7
    %v131 = vsub.s32 %v128, %v130
    %v132 = vrot.slane %v118, %v131
    %v133 = vcombine.high %v125, %v125
    %v134 = vcombine.high %v132, %v132
    %v135 = vcombine.high %v115, %v115
    %v137 = vunpack.c.l.s4 1983009808
    %v138 = vunpack.c.0.s8 %v137
    %v139 = vlaneseq
    %v140 = vshrl.u32 %v139, 7
    %v141 = vsub.s32 %v138, %v140
    %v142 = vrot.slane %v115, %v141
    %v144 = vunpack.c.l.s4 1983009808
    %v145 = vunpack.c.0.s8 %v144
    %v146 = vlaneseq
    %v147 = vshrl.u32 %v146, 7
    %v148 = vsub.s32 %v145, %v147
    %v149 = vrot.slane %v135, %v148
    %v150 = vcombine.high %v142, %v142
    %v151 = vcombine.high %v149, %v149
    %v160 = vsel %vm96, %v125, 0.0
    %v161 = vsel %vm96, %v133, 0.0
    %v162 = vadd.f32 %v160, %v161
    %v163 = vsel %vm96, %v132, 0.0
    %v164 = vadd.f32 %v162, %v163
    %v165 = vsel %vm96, %v134, 0.0
    %v166 = vadd.f32 %v164, %v165
    %v167 = vsel %vm96, %v142, 0.0
    %v168 = vadd.f32 %v166, %v167
    %v169 = vsel %vm96, %v150, 0.0
    %v170 = vadd.f32 %v168, %v169
    %v171 = vsel %vm96, %v149, 0.0
    %v172 = vadd.f32 %v170, %v171
    %v173 = vsel %vm96, %v151, 0.0
    %v174 = vadd.f32 %v172, %v173
    %175 = vadd.xlane.f32.xlu0 %v174
    %v176 = vpop.xlane.xlu0 %175
    %v177 = vmul.f32 %v113, 0.0009765625
    %v178 = vmul.f32 %v176, 0.0009765625
    %v179 = vmul.f32 %v177, %v177
    %v180 = vsub.f32 %v178, %v179
    %v181 = vmax.f32 %v180, 0.0
    %v182 = vadd.f32 %v181, 1e-05
    %v183 = vrsqrt.pop %v182
    %v184 = vld [vmem:[#allocation5] sm:$0xff]
    %v186 = vlaneseq
    %v187 = vshrl.u32 %v186, 7
    %v188 = vsub.s32 0, %v187
    %v189 = vrot.slane %v184, %v188
    %v190 = vlaneseq
    %v191 = vshrl.u32 %v190, 7
    %v192 = vsub.s32 1, %v191
    %v193 = vrot.slane %v184, %v192
    %v194 = vlaneseq
    %v195 = vshrl.u32 %v194, 7
    %v196 = vsub.s32 2, %v195
    %v197 = vrot.slane %v184, %v196
    %v198 = vlaneseq
    %v199 = vshrl.u32 %v198, 7
    %v200 = vsub.s32 3, %v199
    %v201 = vrot.slane %v184, %v200
    %v202 = vlaneseq
    %v203 = vshrl.u32 %v202, 7
    %v204 = vsub.s32 4, %v203
    %v205 = vrot.slane %v184, %v204
    %v206 = vlaneseq
    %v207 = vshrl.u32 %v206, 7
    %v208 = vsub.s32 5, %v207
    %v209 = vrot.slane %v184, %v208
    %v210 = vlaneseq
    %v211 = vshrl.u32 %v210, 7
    %v212 = vsub.s32 6, %v211
    %v213 = vrot.slane %v184, %v212
    %v214 = vlaneseq
    %v215 = vshrl.u32 %v214, 7
    %v216 = vsub.s32 7, %v215
    %v217 = vrot.slane %v184, %v216
    %v226 = vmul.f32 %v189, %v183
    %v227 = vmul.f32 %v193, %v183
    %v228 = vmul.f32 %v197, %v183
    %v229 = vmul.f32 %v201, %v183
    %v230 = vmul.f32 %v205, %v183
    %v231 = vmul.f32 %v209, %v183
    %v232 = vmul.f32 %v213, %v183
    %v233 = vmul.f32 %v217, %v183
    %v236 = vunpack.c.l.s4 269488144
    %v237 = vunpack.c.0.s8 %v236
    %v238 = vlaneseq
    %v239 = vshrl.u32 %v238, 7
    %v240 = vsub.s32 %v237, %v239
    %v241 = vrot.slane %v177, %v240
    %v243 = vsub.f32 %v50, %v241
    %v244 = vsub.f32 %v51, %v241
    %v253 = vcombine.low %v226, %v227
    %v254 = vcombine.low %v228, %v229
    %v256 = vunpack.c.l.s4 1983009808
    %v257 = vunpack.c.0.s8 %v256
    %v258 = vlaneseq
    %v259 = vshrl.u32 %v258, 7
    %v260 = vsub.s32 %v257, %v259
    %v261 = vrot.slane %v253, %v260
    %v263 = vunpack.c.l.s4 1983009808
    %v264 = vunpack.c.0.s8 %v263
    %v265 = vlaneseq
    %v266 = vshrl.u32 %v265, 7
    %v267 = vsub.s32 %v264, %v266
    %v268 = vrot.slane %v254, %v267
    %v269 = vcombine.low %v261, %v268
    %v270 = vcombine.low %v230, %v231
    %v271 = vcombine.low %v232, %v233
    %v273 = vunpack.c.l.s4 1983009808
    %v274 = vunpack.c.0.s8 %v273
    %v275 = vlaneseq
    %v276 = vshrl.u32 %v275, 7
    %v277 = vsub.s32 %v274, %v276
    %v278 = vrot.slane %v270, %v277
    %v280 = vunpack.c.l.s4 1983009808
    %v281 = vunpack.c.0.s8 %v280
    %v282 = vlaneseq
    %v283 = vshrl.u32 %v282, 7
    %v284 = vsub.s32 %v281, %v283
    %v285 = vrot.slane %v271, %v284
    %v286 = vcombine.low %v278, %v285
    %v289 = vmul.f32 %v243, %v269
    %v290 = vmul.f32 %v244, %v286
    %v291 = vld [vmem:[#allocation7] sm:$0xff]
    %v293 = vlaneseq
    %v294 = vshrl.u32 %v293, 7
    %v295 = vsub.s32 0, %v294
    %v296 = vrot.slane %v291, %v295
    %v297 = vlaneseq
    %v298 = vshrl.u32 %v297, 7
    %v299 = vsub.s32 1, %v298
    %v300 = vrot.slane %v291, %v299
    %v301 = vlaneseq
    %v302 = vshrl.u32 %v301, 7
    %v303 = vsub.s32 2, %v302
    %v304 = vrot.slane %v291, %v303
    %v305 = vlaneseq
    %v306 = vshrl.u32 %v305, 7
    %v307 = vsub.s32 3, %v306
    %v308 = vrot.slane %v291, %v307
    %v309 = vlaneseq
    %v310 = vshrl.u32 %v309, 7
    %v311 = vsub.s32 4, %v310
    %v312 = vrot.slane %v291, %v311
    %v313 = vlaneseq
    %v314 = vshrl.u32 %v313, 7
    %v315 = vsub.s32 5, %v314
    %v316 = vrot.slane %v291, %v315
    %v317 = vlaneseq
    %v318 = vshrl.u32 %v317, 7
    %v319 = vsub.s32 6, %v318
    %v320 = vrot.slane %v291, %v319
    %v321 = vlaneseq
    %v322 = vshrl.u32 %v321, 7
    %v323 = vsub.s32 7, %v322
    %v324 = vrot.slane %v291, %v323
    %v325 = vcombine.low %v296, %v300
    %v326 = vcombine.low %v304, %v308
    %v328 = vunpack.c.l.s4 1983009808
    %v329 = vunpack.c.0.s8 %v328
    %v330 = vlaneseq
    %v331 = vshrl.u32 %v330, 7
    %v332 = vsub.s32 %v329, %v331
    %v333 = vrot.slane %v325, %v332
    %v335 = vunpack.c.l.s4 1983009808
    %v336 = vunpack.c.0.s8 %v335
    %v337 = vlaneseq
    %v338 = vshrl.u32 %v337, 7
    %v339 = vsub.s32 %v336, %v338
    %v340 = vrot.slane %v326, %v339
    %v341 = vcombine.low %v333, %v340
    %v342 = vcombine.low %v312, %v316
    %v343 = vcombine.low %v320, %v324
    %v345 = vunpack.c.l.s4 1983009808
    %v346 = vunpack.c.0.s8 %v345
    %v347 = vlaneseq
    %v348 = vshrl.u32 %v347, 7
    %v349 = vsub.s32 %v346, %v348
    %v350 = vrot.slane %v342, %v349
    %v352 = vunpack.c.l.s4 1983009808
    %v353 = vunpack.c.0.s8 %v352
    %v354 = vlaneseq
    %v355 = vshrl.u32 %v354, 7
    %v356 = vsub.s32 %v353, %v355
    %v357 = vrot.slane %v343, %v356
    %v358 = vcombine.low %v350, %v357
    %v361 = vadd.f32 %v289, %v341
    %v362 = vadd.f32 %v290, %v358
    %363 = vst [vmem:[#allocation8] sm:$0xff] %v361
    %364 = vst [vmem:[#allocation8 + $0x8] sm:$0xff] %v362
    // Predicated region
    $region26: #{tpu_custom_call.1} parent=1 // pred_check
      _
    $region27: #{tpu_custom_call.1} parent=1 // pred_check_branch
      %366 = sbr.rel (0) target = $region29
    $region28: #{tpu_custom_call.1} parent=1 // pred_region
      %s368 = ssub.s32 256, 256
      %369 = vsyncadd [#allocation4], %s368
      %s371 = sshll.u32 [#allocation8], 4
      %s372 = int_to_ptr.vmem [resolvable:$true] %s371
      %374 = dma.vmem_to_hbm [thread:$0]  %s372, 256, %s3, [#allocation4]
    $region29: #{tpu_custom_call.1} parent=1 // pred_fallthru
      _
    // Predicated region
    $region30: #{tpu_custom_call.1} parent=1 // pred_check
      _
    $region31: #{tpu_custom_call.1} parent=1 // pred_check_branch
      %376 = sbr.rel (0) target = $region33
    $region32: #{tpu_custom_call.1} parent=1 // pred_region
      %377 = dma.done [#allocation4], 256
    $region33: #{tpu_custom_call.1} parent=1 // pred_fallthru
      _
    %378 = vsyncpa [#allocation3], 1
    %379 = vsyncpa [#allocation6], 1
    %380 = vsyncpa [#allocation4], 1

</llo_original>
